<compile_context>
chip_gen: v7x
topology: tpu7x:2x2x1
jax: 0.10.0
libtpu: 0.0.40
codegen_flags: <defaults>
</compile_context>

<pallas_src>
import functools

import jax
import jax.numpy as jnp
from jax.experimental import pallas as pl
from jax.experimental.pallas import tpu as pltpu


def _round_up(x, m):
    return ((x + m - 1) // m) * m


def _ntxent_kernel(zi_r_ref, zj_r_ref, zi_c_ref, zj_c_ref, pos_ref, out_ref,
                   d_i_ref, d_j_ref, *, batch_size, padded_size, temperature,
                   block_r, block_c):
    r = pl.program_id(0)
    c = pl.program_id(1)
    n_c = pl.num_programs(1)
    inv_t = 1.0 / temperature

    @pl.when(c == 0)
    def _():
        d_i_ref[...] = jnp.zeros_like(d_i_ref)
        d_j_ref[...] = jnp.zeros_like(d_j_ref)

    # Tiles are already L2-normalized and bf16 (done once in the wrapper).
    zi_r = zi_r_ref[...]
    zj_r = zj_r_ref[...]
    zi_c = zi_c_ref[...]
    zj_c = zj_c_ref[...]

    # bf16 MXU operands, f32 accumulation; contract the last (lane) dims so no
    # transpose / re-layout copy is materialized.
    dn = (((1,), (1,)), ((), ()))

    def sim(a, b):
        return jax.lax.dot_general(a, b, dimension_numbers=dn,
                                   preferred_element_type=jnp.float32)

    # Max-shifted exponent: |sim| <= ~1, so exp((s-1)/T) <= ~1 and the f32
    # accumulator cannot overflow for any temperature / batch size.  The +1/T
    # is added back inside the log in the finalize branch.
    def shifted_exp(s):
        return jnp.exp(s * inv_t - inv_t)

    e_ii = shifted_exp(sim(zi_r, zi_c))
    e_ij = shifted_exp(sim(zi_r, zj_c))
    e_ji = shifted_exp(sim(zj_r, zi_c))
    e_jj = shifted_exp(sim(zj_r, zj_c))

    # Fused reductions: one cross-lane (XLU) reduce per accumulator per step.
    d_i_ref[...] += jnp.sum(e_ii + e_ij, axis=1, keepdims=True)
    d_j_ref[...] += jnp.sum(e_ji + e_jj, axis=1, keepdims=True)

    # Exclude the main diagonal (self-similarity) of the 2Bp x 2Bp matrix by
    # subtracting exactly what was accumulated for it, only on tiles whose row
    # and column ranges overlap.  Exact in bf16-sim terms -> no NaN at small T.
    diag_in_tile = ((r * block_r < (c + 1) * block_c)
                    & (c * block_c < (r + 1) * block_r))

    @pl.when(diag_in_tile)
    def _():
        row_ids = r * block_r + jax.lax.broadcasted_iota(
            jnp.int32, (block_r, block_c), 0)
        col_ids = c * block_c + jax.lax.broadcasted_iota(
            jnp.int32, (block_r, block_c), 1)
        diag = (row_ids == col_ids).astype(jnp.float32)
        d_i_ref[...] -= jnp.sum(e_ii * diag, axis=1, keepdims=True)
        d_j_ref[...] -= jnp.sum(e_jj * diag, axis=1, keepdims=True)

    # Padded columns (zero rows after normalization) all live in the LAST
    # column block (padding < block_c); subtract their exact contribution
    # there.  Static Python 'if' -> zero cost when there is no padding.
    if padded_size > batch_size:
        @pl.when(c == n_c - 1)
        def _():
            col_ids = c * block_c + jax.lax.broadcasted_iota(
                jnp.int32, (1, block_c), 1)
            pad = (col_ids >= batch_size).astype(jnp.float32)
            d_i_ref[...] -= jnp.sum((e_ii + e_ij) * pad, axis=1, keepdims=True)
            d_j_ref[...] -= jnp.sum((e_ji + e_jj) * pad, axis=1, keepdims=True)

    @pl.when(c == n_c - 1)
    def _():
        pos = pos_ref[...]                       # (block_r, 1), f32 positives
        # loss = log(denom) - pos/T ; denom = exp(1/T) * d_shift
        #      = log(d_shift) + (1 - pos)/T
        loss_i = jnp.log(d_i_ref[...]) + (1.0 - pos) * inv_t
        loss_j = jnp.log(d_j_ref[...]) + (1.0 - pos) * inv_t
        if padded_size > batch_size:
            row_ids = r * block_r + jax.lax.broadcasted_iota(
                jnp.int32, (block_r, 1), 0)
            valid = row_ids < batch_size
            loss_i = jnp.where(valid, loss_i, 0.0)
            loss_j = jnp.where(valid, loss_j, 0.0)
        # TODO(synk): (block_r, 2) store is lane-sparse (vst.msk); only once per
        #             row block, so left as-is rather than risking a relayout.
        out_ref[...] = jnp.concatenate([loss_i, loss_j], axis=1)


def contrastive_loss(emb_i, emb_j, *, temperature=0.5):
    assert emb_i.shape == emb_j.shape and emb_i.ndim == 2
    assert temperature > 0.0
    B, D = emb_i.shape

    # Lane/sublane-friendly padding.
    Dp = max(_round_up(D, 128), 128)
    B8 = _round_up(B, 8)
    block_c = B8 if B8 <= 512 else 256
    Bp = _round_up(B8, block_c)
    n_c = Bp // block_c
    # Enlarge the row block (halves column re-streaming + step count) while
    # keeping >= 2 row blocks so the parallel axis still shards across the two
    # v7x TensorCores.
    block_r = block_c
    if Bp % (2 * block_c) == 0 and Bp // (2 * block_c) >= 2:
        block_r = 2 * block_c
    n_r = Bp // block_r

    # Pad + normalize (f32, F.normalize semantics) + bf16-cast ONCE in XLA.
    def prep(x):
        xp = jnp.zeros((Bp, Dp), jnp.float32).at[:B, :D].set(
            x.astype(jnp.float32))
        nrm = jnp.sqrt(jnp.sum(xp * xp, axis=1, keepdims=True))
        return xp / jnp.maximum(nrm, 1e-12)

    zi = prep(emb_i)
    zj = prep(emb_j)
    pos = jnp.sum(zi * zj, axis=1, keepdims=True)   # (Bp, 1) f32 positives
    zi_bf = zi.astype(jnp.bfloat16)
    zj_bf = zj.astype(jnp.bfloat16)

    kernel = functools.partial(
        _ntxent_kernel, batch_size=B, padded_size=Bp,
        temperature=float(temperature), block_r=block_r, block_c=block_c)

    # VMEM budget: double-buffered bf16 tiles + the four block_r x block_c f32
    # exp intermediates + slack; capped below v7x's 64 MiB physical VMEM.
    tile_bytes = 2 * 2 * (block_r + block_c) * Dp * 2
    inter_bytes = 4 * block_r * block_c * 4
    vmem_limit = int(min(max(tile_bytes + inter_bytes + (2 << 20), 32 << 20),
                         56 << 20))

    per_row = pl.pallas_call(
        kernel,
        out_shape=jax.ShapeDtypeStruct((Bp, 2), jnp.float32),
        grid=(n_r, n_c),
        in_specs=[
            pl.BlockSpec((block_r, Dp), lambda r, c: (r, 0)),  # z_i row tile
            pl.BlockSpec((block_r, Dp), lambda r, c: (r, 0)),  # z_j row tile
            pl.BlockSpec((block_c, Dp), lambda r, c: (c, 0)),  # z_i col tile
            pl.BlockSpec((block_c, Dp), lambda r, c: (c, 0)),  # z_j col tile
            pl.BlockSpec((block_r, 1), lambda r, c: (r, 0)),   # f32 positives
        ],
        out_specs=pl.BlockSpec((block_r, 2), lambda r, c: (r, 0)),
        scratch_shapes=[
            pltpu.VMEM((block_r, 1), jnp.float32),  # denom accum (z_i rows)
            pltpu.VMEM((block_r, 1), jnp.float32),  # denom accum (z_j rows)
        ],
        compiler_params=pltpu.CompilerParams(
            dimension_semantics=("parallel", "arbitrary"),
            vmem_limit_bytes=vmem_limit,
        ),
    )(zi_bf, zj_bf, zi_bf, zj_bf, pos)

    # Padded rows were written as 0; sum everything and average over 2B.
    return jnp.sum(per_row) / (2.0 * B)


def _reference_loss(emb_i, emb_j, temperature=0.5):
    # Pure-JAX f32 reference mirroring the PyTorch module.
    def norm(x):
        n = jnp.sqrt(jnp.sum(x * x, axis=1, keepdims=True))
        return x / jnp.maximum(n, 1e-12)

    B = emb_i.shape[0]
    reps = jnp.concatenate([norm(emb_i), norm(emb_j)], axis=0)
    sim = reps @ reps.T
    pos = jnp.concatenate(
        [jnp.diagonal(sim, offset=B), jnp.diagonal(sim, offset=-B)], axis=0)
    mask = 1.0 - jnp.eye(2 * B, dtype=jnp.float32)
    nom = jnp.exp(pos / temperature)
    denom = jnp.sum(mask * jnp.exp(sim / temperature), axis=1)
    return jnp.sum(-jnp.log(nom / denom)) / (2 * B)


if __name__ == "__main__":
    key = jax.random.PRNGKey(0)
    k1, k2 = jax.random.split(key)
    batch_size, hidden = 4, 32
    emb_i = jax.random.normal(k1, (batch_size, hidden), dtype=jnp.float32)
    emb_j = jax.random.normal(k2, (batch_size, hidden), dtype=jnp.float32)

    loss = contrastive_loss(emb_i, emb_j, temperature=0.5)
    jax.block_until_ready(loss)

    ref = _reference_loss(emb_i, emb_j, temperature=0.5)
    # bf16 matmul operands perturb the negative similarities slightly.
    assert jnp.allclose(loss, ref, atol=2e-2, rtol=2e-2), (loss, ref)

    print("KERNEL_OK")
</pallas_src>

<mosaic_0001>
module attributes {stable_mosaic.version = 11 : i64} {
  func.func @_ntxent_kernel(%arg0: i32, %arg1: i32, %arg2: memref<8x128xbf16, #tpu.memory_space<vmem>>, %arg3: memref<8x128xbf16, #tpu.memory_space<vmem>>, %arg4: memref<8x128xbf16, #tpu.memory_space<vmem>>, %arg5: memref<8x128xbf16, #tpu.memory_space<vmem>>, %arg6: memref<8x1xf32, #tpu.memory_space<vmem>>, %arg7: memref<8x2xf32, #tpu.memory_space<vmem>>, %arg8: memref<8x1xf32, #tpu.memory_space<vmem>>, %arg9: memref<8x1xf32, #tpu.memory_space<vmem>>) attributes {dimension_semantics = [#tpu.dimension_semantics<parallel>, #tpu.dimension_semantics<arbitrary>], iteration_bounds = array<i64: 1, 1>, scalar_prefetch = 0 : i64, scratch_operands = 2 : i64, tpu.core_type = #tpu.core_type<tc>, window_params = [{transform_indices = @transform_0, window_bounds = array<i64: 8, 128>}, {transform_indices = @transform_1, window_bounds = array<i64: 8, 128>}, {transform_indices = @transform_2, window_bounds = array<i64: 8, 128>}, {transform_indices = @transform_3, window_bounds = array<i64: 8, 128>}, {transform_indices = @transform_4, window_bounds = array<i64: 8, 1>}, {transform_indices = @transform_5, window_bounds = array<i64: 8, 2>}]} {
    %c0_i32 = arith.constant 0 : i32
    %0 = arith.cmpi eq, %arg1, %c0_i32 : i32
    %1 = arith.extui %0 : i1 to i32
    %c0_i32_0 = arith.constant 0 : i32
    %2 = arith.cmpi ne, %1, %c0_i32_0 : i32
    scf.if %2 {
      %cst_38 = arith.constant 0.000000e+00 : f32
      %60 = vector.broadcast %cst_38 : f32 to vector<8x1xf32>
      %c0_39 = arith.constant 0 : index
      %c0_40 = arith.constant 0 : index
      %61 = vector.load %arg8[%c0_39, %c0_40] : memref<8x1xf32, #tpu.memory_space<vmem>>, vector<8x1xf32>
      tpu.vector_store %arg8[%c0_39, %c0_40], %60 {strides = array<i32>} : memref<8x1xf32, #tpu.memory_space<vmem>>, vector<8x1xf32>,
      %cst_41 = arith.constant 0.000000e+00 : f32
      %62 = vector.broadcast %cst_41 : f32 to vector<8x1xf32>
      %c0_42 = arith.constant 0 : index
      %c0_43 = arith.constant 0 : index
      %63 = vector.load %arg9[%c0_42, %c0_43] : memref<8x1xf32, #tpu.memory_space<vmem>>, vector<8x1xf32>
      tpu.vector_store %arg9[%c0_42, %c0_43], %62 {strides = array<i32>} : memref<8x1xf32, #tpu.memory_space<vmem>>, vector<8x1xf32>,
    } else {
    }
    %c0 = arith.constant 0 : index
    %c0_1 = arith.constant 0 : index
    %3 = vector.load %arg2[%c0, %c0_1] : memref<8x128xbf16, #tpu.memory_space<vmem>>, vector<8x128xbf16>
    %c0_2 = arith.constant 0 : index
    %c0_3 = arith.constant 0 : index
    %4 = vector.load %arg3[%c0_2, %c0_3] : memref<8x128xbf16, #tpu.memory_space<vmem>>, vector<8x128xbf16>
    %c0_4 = arith.constant 0 : index
    %c0_5 = arith.constant 0 : index
    %5 = vector.load %arg4[%c0_4, %c0_5] : memref<8x128xbf16, #tpu.memory_space<vmem>>, vector<8x128xbf16>
    %c0_6 = arith.constant 0 : index
    %c0_7 = arith.constant 0 : index
    %6 = vector.load %arg5[%c0_6, %c0_7] : memref<8x128xbf16, #tpu.memory_space<vmem>>, vector<8x128xbf16>
    %cst = arith.constant dense<0.000000e+00> : vector<8x8xf32>
    %7 = tpu.matmul %3, %5, %cst {dimension_numbers = #tpu.dot_dimension_numbers<[1], [1], [0], [0], [0, 0, 1, 0], [], []>} : vector<8x128xbf16>, vector<8x128xbf16>, vector<8x8xf32> -> vector<8x8xf32>
    %cst_8 = arith.constant 2.000000e+00 : f32
    %8 = vector.broadcast %cst_8 : f32 to vector<8x8xf32>
    %9 = arith.mulf %7, %8 : vector<8x8xf32>
    %cst_9 = arith.constant 2.000000e+00 : f32
    %10 = vector.broadcast %cst_9 : f32 to vector<8x8xf32>
    %11 = arith.subf %9, %10 : vector<8x8xf32>
    %12 = math.exp %11 : vector<8x8xf32>
    %cst_10 = arith.constant dense<0.000000e+00> : vector<8x8xf32>
    %13 = tpu.matmul %3, %6, %cst_10 {dimension_numbers = #tpu.dot_dimension_numbers<[1], [1], [0], [0], [0, 0, 1, 0], [], []>} : vector<8x128xbf16>, vector<8x128xbf16>, vector<8x8xf32> -> vector<8x8xf32>
    %cst_11 = arith.constant 2.000000e+00 : f32
    %14 = vector.broadcast %cst_11 : f32 to vector<8x8xf32>
    %15 = arith.mulf %13, %14 : vector<8x8xf32>
    %cst_12 = arith.constant 2.000000e+00 : f32
    %16 = vector.broadcast %cst_12 : f32 to vector<8x8xf32>
    %17 = arith.subf %15, %16 : vector<8x8xf32>
    %18 = math.exp %17 : vector<8x8xf32>
    %cst_13 = arith.constant dense<0.000000e+00> : vector<8x8xf32>
    %19 = tpu.matmul %4, %5, %cst_13 {dimension_numbers = #tpu.dot_dimension_numbers<[1], [1], [0], [0], [0, 0, 1, 0], [], []>} : vector<8x128xbf16>, vector<8x128xbf16>, vector<8x8xf32> -> vector<8x8xf32>
    %cst_14 = arith.constant 2.000000e+00 : f32
    %20 = vector.broadcast %cst_14 : f32 to vector<8x8xf32>
    %21 = arith.mulf %19, %20 : vector<8x8xf32>
    %cst_15 = arith.constant 2.000000e+00 : f32
    %22 = vector.broadcast %cst_15 : f32 to vector<8x8xf32>
    %23 = arith.subf %21, %22 : vector<8x8xf32>
    %24 = math.exp %23 : vector<8x8xf32>
    %cst_16 = arith.constant dense<0.000000e+00> : vector<8x8xf32>
    %25 = tpu.matmul %4, %6, %cst_16 {dimension_numbers = #tpu.dot_dimension_numbers<[1], [1], [0], [0], [0, 0, 1, 0], [], []>} : vector<8x128xbf16>, vector<8x128xbf16>, vector<8x8xf32> -> vector<8x8xf32>
    %cst_17 = arith.constant 2.000000e+00 : f32
    %26 = vector.broadcast %cst_17 : f32 to vector<8x8xf32>
    %27 = arith.mulf %25, %26 : vector<8x8xf32>
    %cst_18 = arith.constant 2.000000e+00 : f32
    %28 = vector.broadcast %cst_18 : f32 to vector<8x8xf32>
    %29 = arith.subf %27, %28 : vector<8x8xf32>
    %30 = math.exp %29 : vector<8x8xf32>
    %c0_19 = arith.constant 0 : index
    %c0_20 = arith.constant 0 : index
    %31 = vector.load %arg8[%c0_19, %c0_20] : memref<8x1xf32, #tpu.memory_space<vmem>>, vector<8x1xf32>
    %32 = arith.addf %12, %18 : vector<8x8xf32>
    %cst_21 = arith.constant dense<0.000000e+00> : vector<8xf32>
    %33 = vector.multi_reduction <add>, %32, %cst_21 [1] : vector<8x8xf32> to vector<8xf32>
    %34 = vector.shape_cast %33 : vector<8xf32> to vector<8x1xf32>
    %35 = arith.addf %31, %34 : vector<8x1xf32>
    %c0_22 = arith.constant 0 : index
    %c0_23 = arith.constant 0 : index
    %36 = vector.load %arg8[%c0_22, %c0_23] : memref<8x1xf32, #tpu.memory_space<vmem>>, vector<8x1xf32>
    tpu.vector_store %arg8[%c0_22, %c0_23], %35 {strides = array<i32>} : memref<8x1xf32, #tpu.memory_space<vmem>>, vector<8x1xf32>,
    %c0_24 = arith.constant 0 : index
    %c0_25 = arith.constant 0 : index
    %37 = vector.load %arg9[%c0_24, %c0_25] : memref<8x1xf32, #tpu.memory_space<vmem>>, vector<8x1xf32>
    %38 = arith.addf %24, %30 : vector<8x8xf32>
    %cst_26 = arith.constant dense<0.000000e+00> : vector<8xf32>
    %39 = vector.multi_reduction <add>, %38, %cst_26 [1] : vector<8x8xf32> to vector<8xf32>
    %40 = vector.shape_cast %39 : vector<8xf32> to vector<8x1xf32>
    %41 = arith.addf %37, %40 : vector<8x1xf32>
    %c0_27 = arith.constant 0 : index
    %c0_28 = arith.constant 0 : index
    %42 = vector.load %arg9[%c0_27, %c0_28] : memref<8x1xf32, #tpu.memory_space<vmem>>, vector<8x1xf32>
    tpu.vector_store %arg9[%c0_27, %c0_28], %41 {strides = array<i32>} : memref<8x1xf32, #tpu.memory_space<vmem>>, vector<8x1xf32>,
    %c8_i32 = arith.constant 8 : i32
    %43 = arith.muli %arg0, %c8_i32 : i32
    %c1_i32 = arith.constant 1 : i32
    %44 = arith.addi %arg1, %c1_i32 : i32
    %c8_i32_29 = arith.constant 8 : i32
    %45 = arith.muli %44, %c8_i32_29 : i32
    %46 = arith.cmpi slt, %43, %45 : i32
    %c8_i32_30 = arith.constant 8 : i32
    %47 = arith.muli %arg1, %c8_i32_30 : i32
    %c1_i32_31 = arith.constant 1 : i32
    %48 = arith.addi %arg0, %c1_i32_31 : i32
    %c8_i32_32 = arith.constant 8 : i32
    %49 = arith.muli %48, %c8_i32_32 : i32
    %50 = arith.cmpi slt, %47, %49 : i32
    %51 = arith.andi %46, %50 : i1
    %52 = arith.extui %51 : i1 to i32
    %c0_i32_33 = arith.constant 0 : i32
    %53 = arith.cmpi ne, %52, %c0_i32_33 : i32
    scf.if %53 {
      %c8_i32_38 = arith.constant 8 : i32
      %60 = arith.muli %arg0, %c8_i32_38 : i32
      %61 = tpu.iota {dimensions = array<i32: 0>} : vector<8x8xi32>
      %62 = vector.broadcast %60 : i32 to vector<8x8xi32>
      %63 = arith.addi %62, %61 : vector<8x8xi32>
      %c8_i32_39 = arith.constant 8 : i32
      %64 = arith.muli %arg1, %c8_i32_39 : i32
      %65 = tpu.iota {dimensions = array<i32: 1>} : vector<8x8xi32>
      %66 = vector.broadcast %64 : i32 to vector<8x8xi32>
      %67 = arith.addi %66, %65 : vector<8x8xi32>
      %68 = arith.cmpi eq, %63, %67 : vector<8x8xi32>
      %69 = arith.extui %68 : vector<8x8xi1> to vector<8x8xi32>
      %70 = arith.sitofp %69 : vector<8x8xi32> to vector<8x8xf32>
      %c0_40 = arith.constant 0 : index
      %c0_41 = arith.constant 0 : index
      %71 = vector.load %arg8[%c0_40, %c0_41] : memref<8x1xf32, #tpu.memory_space<vmem>>, vector<8x1xf32>
      %72 = arith.mulf %12, %70 : vector<8x8xf32>
      %cst_42 = arith.constant dense<0.000000e+00> : vector<8xf32>
      %73 = vector.multi_reduction <add>, %72, %cst_42 [1] : vector<8x8xf32> to vector<8xf32>
      %74 = vector.shape_cast %73 : vector<8xf32> to vector<8x1xf32>
      %75 = arith.subf %71, %74 : vector<8x1xf32>
      %c0_43 = arith.constant 0 : index
      %c0_44 = arith.constant 0 : index
      %76 = vector.load %arg8[%c0_43, %c0_44] : memref<8x1xf32, #tpu.memory_space<vmem>>, vector<8x1xf32>
      tpu.vector_store %arg8[%c0_43, %c0_44], %75 {strides = array<i32>} : memref<8x1xf32, #tpu.memory_space<vmem>>, vector<8x1xf32>,
      %c0_45 = arith.constant 0 : index
      %c0_46 = arith.constant 0 : index
      %77 = vector.load %arg9[%c0_45, %c0_46] : memref<8x1xf32, #tpu.memory_space<vmem>>, vector<8x1xf32>
      %78 = arith.mulf %30, %70 : vector<8x8xf32>
      %cst_47 = arith.constant dense<0.000000e+00> : vector<8xf32>
      %79 = vector.multi_reduction <add>, %78, %cst_47 [1] : vector<8x8xf32> to vector<8xf32>
      %80 = vector.shape_cast %79 : vector<8xf32> to vector<8x1xf32>
      %81 = arith.subf %77, %80 : vector<8x1xf32>
      %c0_48 = arith.constant 0 : index
      %c0_49 = arith.constant 0 : index
      %82 = vector.load %arg9[%c0_48, %c0_49] : memref<8x1xf32, #tpu.memory_space<vmem>>, vector<8x1xf32>
      tpu.vector_store %arg9[%c0_48, %c0_49], %81 {strides = array<i32>} : memref<8x1xf32, #tpu.memory_space<vmem>>, vector<8x1xf32>,
    } else {
    }
    %c0_i32_34 = arith.constant 0 : i32
    %54 = arith.cmpi eq, %arg1, %c0_i32_34 : i32
    %55 = arith.extui %54 : i1 to i32
    %c0_i32_35 = arith.constant 0 : i32
    %56 = arith.cmpi ne, %55, %c0_i32_35 : i32
    scf.if %56 {
      %c8_i32_38 = arith.constant 8 : i32
      %60 = arith.muli %arg1, %c8_i32_38 : i32
      %61 = tpu.iota {dimensions = array<i32: 1>} : vector<1x8xi32>
      %62 = vector.broadcast %60 : i32 to vector<1x8xi32>
      %63 = arith.addi %62, %61 : vector<1x8xi32>
      %c4_i32 = arith.constant 4 : i32
      %64 = vector.broadcast %c4_i32 : i32 to vector<1x8xi32>
      %65 = arith.cmpi sge, %63, %64 : vector<1x8xi32>
      %66 = arith.extui %65 : vector<1x8xi1> to vector<1x8xi32>
      %67 = arith.sitofp %66 : vector<1x8xi32> to vector<1x8xf32>
      %c0_39 = arith.constant 0 : index
      %c0_40 = arith.constant 0 : index
      %68 = vector.load %arg8[%c0_39, %c0_40] : memref<8x1xf32, #tpu.memory_space<vmem>>, vector<8x1xf32>
      %69 = arith.addf %12, %18 : vector<8x8xf32>
      %70 = vector.broadcast %67 : vector<1x8xf32> to vector<8x8xf32>
      %71 = arith.mulf %69, %70 : vector<8x8xf32>
      %cst_41 = arith.constant dense<0.000000e+00> : vector<8xf32>
      %72 = vector.multi_reduction <add>, %71, %cst_41 [1] : vector<8x8xf32> to vector<8xf32>
      %73 = vector.shape_cast %72 : vector<8xf32> to vector<8x1xf32>
      %74 = arith.subf %68, %73 : vector<8x1xf32>
      %c0_42 = arith.constant 0 : index
      %c0_43 = arith.constant 0 : index
      %75 = vector.load %arg8[%c0_42, %c0_43] : memref<8x1xf32, #tpu.memory_space<vmem>>, vector<8x1xf32>
      tpu.vector_store %arg8[%c0_42, %c0_43], %74 {strides = array<i32>} : memref<8x1xf32, #tpu.memory_space<vmem>>, vector<8x1xf32>,
      %c0_44 = arith.constant 0 : index
      %c0_45 = arith.constant 0 : index
      %76 = vector.load %arg9[%c0_44, %c0_45] : memref<8x1xf32, #tpu.memory_space<vmem>>, vector<8x1xf32>
      %77 = arith.addf %24, %30 : vector<8x8xf32>
      %78 = vector.broadcast %67 : vector<1x8xf32> to vector<8x8xf32>
      %79 = arith.mulf %77, %78 : vector<8x8xf32>
      %cst_46 = arith.constant dense<0.000000e+00> : vector<8xf32>
      %80 = vector.multi_reduction <add>, %79, %cst_46 [1] : vector<8x8xf32> to vector<8xf32>
      %81 = vector.shape_cast %80 : vector<8xf32> to vector<8x1xf32>
      %82 = arith.subf %76, %81 : vector<8x1xf32>
      %c0_47 = arith.constant 0 : index
      %c0_48 = arith.constant 0 : index
      %83 = vector.load %arg9[%c0_47, %c0_48] : memref<8x1xf32, #tpu.memory_space<vmem>>, vector<8x1xf32>
      tpu.vector_store %arg9[%c0_47, %c0_48], %82 {strides = array<i32>} : memref<8x1xf32, #tpu.memory_space<vmem>>, vector<8x1xf32>,
    } else {
    }
    %c0_i32_36 = arith.constant 0 : i32
    %57 = arith.cmpi eq, %arg1, %c0_i32_36 : i32
    %58 = arith.extui %57 : i1 to i32
    %c0_i32_37 = arith.constant 0 : i32
    %59 = arith.cmpi ne, %58, %c0_i32_37 : i32
    scf.if %59 {
      %c0_38 = arith.constant 0 : index
      %c0_39 = arith.constant 0 : index
      %60 = vector.load %arg6[%c0_38, %c0_39] : memref<8x1xf32, #tpu.memory_space<vmem>>, vector<8x1xf32>
      %c0_40 = arith.constant 0 : index
      %c0_41 = arith.constant 0 : index
      %61 = vector.load %arg8[%c0_40, %c0_41] : memref<8x1xf32, #tpu.memory_space<vmem>>, vector<8x1xf32>
      %62 = math.log %61 : vector<8x1xf32>
      %cst_42 = arith.constant 1.000000e+00 : f32
      %63 = vector.broadcast %cst_42 : f32 to vector<8x1xf32>
      %64 = arith.subf %63, %60 : vector<8x1xf32>
      %cst_43 = arith.constant 2.000000e+00 : f32
      %65 = vector.broadcast %cst_43 : f32 to vector<8x1xf32>
      %66 = arith.mulf %64, %65 : vector<8x1xf32>
      %67 = arith.addf %62, %66 : vector<8x1xf32>
      %c0_44 = arith.constant 0 : index
      %c0_45 = arith.constant 0 : index
      %68 = vector.load %arg9[%c0_44, %c0_45] : memref<8x1xf32, #tpu.memory_space<vmem>>, vector<8x1xf32>
      %69 = math.log %68 : vector<8x1xf32>
      %cst_46 = arith.constant 1.000000e+00 : f32
      %70 = vector.broadcast %cst_46 : f32 to vector<8x1xf32>
      %71 = arith.subf %70, %60 : vector<8x1xf32>
      %cst_47 = arith.constant 2.000000e+00 : f32
      %72 = vector.broadcast %cst_47 : f32 to vector<8x1xf32>
      %73 = arith.mulf %71, %72 : vector<8x1xf32>
      %74 = arith.addf %69, %73 : vector<8x1xf32>
      %c8_i32_48 = arith.constant 8 : i32
      %75 = arith.muli %arg0, %c8_i32_48 : i32
      %76 = tpu.iota {dimensions = array<i32: 0>} : vector<8x1xi32>
      %77 = vector.broadcast %75 : i32 to vector<8x1xi32>
      %78 = arith.addi %77, %76 : vector<8x1xi32>
      %c4_i32 = arith.constant 4 : i32
      %79 = vector.broadcast %c4_i32 : i32 to vector<8x1xi32>
      %80 = arith.cmpi slt, %78, %79 : vector<8x1xi32>
      %cst_49 = arith.constant 0.000000e+00 : f32
      %81 = vector.broadcast %cst_49 : f32 to vector<8x1xf32>
      %82 = arith.select %80, %67, %81 : vector<8x1xi1>, vector<8x1xf32>
      %cst_50 = arith.constant 0.000000e+00 : f32
      %83 = vector.broadcast %cst_50 : f32 to vector<8x1xf32>
      %84 = arith.select %80, %74, %83 : vector<8x1xi1>, vector<8x1xf32>
      %85 = tpu.concatenate %82, %84 in 1 : vector<8x1xf32>, vector<8x1xf32> -> vector<8x2xf32>
      %c0_51 = arith.constant 0 : index
      %c0_52 = arith.constant 0 : index
      %86 = vector.load %arg7[%c0_51, %c0_52] : memref<8x2xf32, #tpu.memory_space<vmem>>, vector<8x2xf32>
      tpu.vector_store %arg7[%c0_51, %c0_52], %85 {strides = array<i32>} : memref<8x2xf32, #tpu.memory_space<vmem>>, vector<8x2xf32>,
    } else {
    }
    return
  }
  func.func @transform_0(%arg0: i32, %arg1: i32) -> (i32, i32) {
    %c0_i32 = arith.constant 0 : i32
    %c0_i32_0 = arith.constant 0 : i32
    return %arg0, %c0_i32 : i32, i32
  }
  func.func @transform_1(%arg0: i32, %arg1: i32) -> (i32, i32) {
    %c0_i32 = arith.constant 0 : i32
    %c0_i32_0 = arith.constant 0 : i32
    return %arg0, %c0_i32 : i32, i32
  }
  func.func @transform_2(%arg0: i32, %arg1: i32) -> (i32, i32) {
    %c0_i32 = arith.constant 0 : i32
    %c0_i32_0 = arith.constant 0 : i32
    return %arg1, %c0_i32 : i32, i32
  }
  func.func @transform_3(%arg0: i32, %arg1: i32) -> (i32, i32) {
    %c0_i32 = arith.constant 0 : i32
    %c0_i32_0 = arith.constant 0 : i32
    return %arg1, %c0_i32 : i32, i32
  }
  func.func @transform_4(%arg0: i32, %arg1: i32) -> (i32, i32) {
    %c0_i32 = arith.constant 0 : i32
    %c0_i32_0 = arith.constant 0 : i32
    return %arg0, %c0_i32 : i32, i32
  }
  func.func @transform_5(%arg0: i32, %arg1: i32) -> (i32, i32) {
    %c0_i32 = arith.constant 0 : i32
    %c0_i32_0 = arith.constant 0 : i32
    return %arg0, %c0_i32 : i32, i32
  }
}

</mosaic_0001>

<llo_original>
// kernel: tpu_custom_call.1
$region0: #{tpu_custom_call.1}
  #allocation0 [shape = 'u32[]', space=smem, size = 0x4, offset = 0x4, fixed_abs, tag = 'smem constant byte address 0x4 - core index']
  #allocation1 [shape = 'u32[144,128]{1,0:T(1,128)}', space=vmem, size = 0x12000, scoped, tag = 'internal scratch']
  #allocation2 [shape = 'f32[8,1]{1,0:T(8,128)}', space=vmem, size = 0x1000, scoped, tag = 'scratch operand']
  #allocation3 [shape = 'f32[8,1]{1,0:T(8,128)}', space=vmem, size = 0x1000, scoped, tag = 'scratch operand']
  %s0 = inlined_call_operand.vmem [shape: bf16[8,128], index: 0, kind: input, shape index: {}]
  %s1 = inlined_call_operand.vmem [shape: bf16[8,128], index: 1, kind: input, shape index: {}]
  %s2 = inlined_call_operand.vmem [shape: bf16[8,128], index: 2, kind: input, shape index: {}]
  %s3 = inlined_call_operand.vmem [shape: bf16[8,128], index: 3, kind: input, shape index: {}]
  %s4 = inlined_call_operand.vmem [shape: f32[8,1], index: 4, kind: input, shape index: {}]
  %s5 = inlined_call_operand.vmem [shape: f32[8,2], index: 5, kind: output, shape index: {}]
  %s6 = sld [smem:[#allocation0]]
  $region42: #{tpu_custom_call.1} parent=0
    _
  %s8 = ssub.s32 1, %s6
  %s9 = scalar_select 0, %s8, %s6
  // Predicated region
  $region2: #{tpu_custom_call.1} parent=0 // pred_check
    _
  $region3: #{tpu_custom_call.1} parent=0 // pred_check_branch
    %11 = sbr.rel (0) target = $region5
  $region4: #{tpu_custom_call.1} parent=0 // pred_region
    _
  $region5: #{tpu_custom_call.1} parent=0 // pred_fallthru
    _
  // Predicated region
  $region6: #{tpu_custom_call.1} parent=0 // pred_check
    _
  $region7: #{tpu_custom_call.1} parent=0 // pred_check_branch
    %13 = sbr.rel (0) target = $region9
  $region8: #{tpu_custom_call.1} parent=0 // pred_region
    _
  $region9: #{tpu_custom_call.1} parent=0 // pred_fallthru
    _
  // Predicated region
  $region10: #{tpu_custom_call.1} parent=0 // pred_check
    _
  $region11: #{tpu_custom_call.1} parent=0 // pred_check_branch
    %15 = sbr.rel (0) target = $region13
  $region12: #{tpu_custom_call.1} parent=0 // pred_region
    _
  $region13: #{tpu_custom_call.1} parent=0 // pred_fallthru
    _
  // Predicated region
  $region14: #{tpu_custom_call.1} parent=0 // pred_check
    _
  $region15: #{tpu_custom_call.1} parent=0 // pred_check_branch
    %17 = sbr.rel (0) target = $region17
  $region16: #{tpu_custom_call.1} parent=0 // pred_region
    _
  $region17: #{tpu_custom_call.1} parent=0 // pred_fallthru
    _
  // Predicated region
  $region18: #{tpu_custom_call.1} parent=0 // pred_check
    _
  $region19: #{tpu_custom_call.1} parent=0 // pred_check_branch
    %19 = sbr.rel (0) target = $region21
  $region20: #{tpu_custom_call.1} parent=0 // pred_region
    _
  $region21: #{tpu_custom_call.1} parent=0 // pred_fallthru
    _
  %p21 = scmp.eq.s32.totalorder 0, 0
  // Predicated region
  $region22: #{tpu_custom_call.1} parent=0 // pred_check
    %p22 = pneg %p21
  $region23: #{tpu_custom_call.1} parent=0 // pred_check_branch
    %24 = sbr.rel (%p22) target = $region25
  $region24: #{tpu_custom_call.1} parent=0 // pred_region
    %vm25 = vcmask 7168
    %26 = vst.msk [vmem:[#allocation2] sm:$0xff] %vm25, 0.0
    %27 = vst.msk [vmem:[#allocation3] sm:$0xff] %vm25, 0.0
  $region25: #{tpu_custom_call.1} parent=0 // pred_fallthru
    _
  %v28 = vld [vmem:[%s0] sm:$0xf]
  %v29 = vld [vmem:[%s1] sm:$0xf]
  %v30 = vld [vmem:[%s2] sm:$0xf]
  %v31 = vld [vmem:[%s3] sm:$0xf]
  %32 = vmatprep.subr.bf16.mxu0 0
  %33 = vmatpush1.bf16.xpose.msra.mxu0 %v30
  %34 = vmatprep.subr.bf16.mxu0 0
  %35 = vmatpush1.bf16.xpose.msra.mxu0 0
  %36 = vmatprep.subr.bf16.mxu0 0
  %37 = vmatpush1.bf16.xpose.msra.mxu0 0
  %38 = vmatprep.subr.bf16.mxu0 0
  %39 = vmatpush1.bf16.xpose.msra.mxu0 0
  %40 = vmatprep.subr.bf16.mxu0 0
  %41 = vmatpush1.bf16.xpose.msra.mxu0 0
  %42 = vmatprep.subr.bf16.mxu0 0
  %43 = vmatpush1.bf16.xpose.msra.mxu0 0
  %44 = vmatprep.subr.bf16.mxu0 0
  %45 = vmatpush1.bf16.xpose.msra.mxu0 0
  %46 = vmatprep.subr.bf16.mxu0 0
  %47 = vmatpush1.bf16.xpose.msra.mxu0 0
  %48 = vmatprep.subr.bf16.mxu0 0
  %49 = vmatpush1.bf16.xpose.msra.mxu0 0
  %50 = vmatprep.subr.bf16.mxu0 0
  %51 = vmatpush1.bf16.xpose.msra.mxu0 0
  %52 = vmatprep.subr.bf16.mxu0 0
  %53 = vmatpush1.bf16.xpose.msra.mxu0 0
  %54 = vmatprep.subr.bf16.mxu0 0
  %55 = vmatpush1.bf16.xpose.msra.mxu0 0
  %56 = vmatprep.subr.bf16.mxu0 0
  %57 = vmatpush1.bf16.xpose.msra.mxu0 0
  %58 = vmatprep.subr.bf16.mxu0 0
  %59 = vmatpush1.bf16.xpose.msra.mxu0 0
  %60 = vmatprep.subr.bf16.mxu0 0
  %61 = vmatpush1.bf16.xpose.msra.mxu0 0
  %62 = vmatprep.subr.bf16.mxu0 0
  %63 = vmatpush1.bf16.xpose.msra.mxu0 0
  %64 = vmatprep.mubr.bf16.mxu0 0
  %65 = vmatmul.mubr.bf16.gmra.mrb[0].mxu0 %v28
  %v66 = vpop.f32.mrb[0].mxu0
  %v67 = vadd.f32 0.0, %v66
  %v68 = vpop.f32.mrb[0].mxu0
  %v69 = vpop.f32.mrb[0].mxu0
  %v70 = vpop.f32.mrb[0].mxu0
  %71 = vdwg.mxu0
  %v72 = vmul.f32 %v67, 2.0
  %v73 = vsub.f32 %v72, 2.0
  %v74 = vmul.f32 %v73, 1.442695
  %v75 = vpow.pop %v74
  %76 = vmatprep.subr.bf16.mxu0 0
  %77 = vmatpush1.bf16.xpose.msra.mxu0 %v31
  %78 = vmatprep.subr.bf16.mxu0 0
  %79 = vmatpush1.bf16.xpose.msra.mxu0 0
  %80 = vmatprep.subr.bf16.mxu0 0
  %81 = vmatpush1.bf16.xpose.msra.mxu0 0
  %82 = vmatprep.subr.bf16.mxu0 0
  %83 = vmatpush1.bf16.xpose.msra.mxu0 0
  %84 = vmatprep.subr.bf16.mxu0 0
  %85 = vmatpush1.bf16.xpose.msra.mxu0 0
  %86 = vmatprep.subr.bf16.mxu0 0
  %87 = vmatpush1.bf16.xpose.msra.mxu0 0
  %88 = vmatprep.subr.bf16.mxu0 0
  %89 = vmatpush1.bf16.xpose.msra.mxu0 0
  %90 = vmatprep.subr.bf16.mxu0 0
  %91 = vmatpush1.bf16.xpose.msra.mxu0 0
  %92 = vmatprep.subr.bf16.mxu0 0
  %93 = vmatpush1.bf16.xpose.msra.mxu0 0
  %94 = vmatprep.subr.bf16.mxu0 0
  %95 = vmatpush1.bf16.xpose.msra.mxu0 0
  %96 = vmatprep.subr.bf16.mxu0 0
  %97 = vmatpush1.bf16.xpose.msra.mxu0 0
  %98 = vmatprep.subr.bf16.mxu0 0
  %99 = vmatpush1.bf16.xpose.msra.mxu0 0
  %100 = vmatprep.subr.bf16.mxu0 0
  %101 = vmatpush1.bf16.xpose.msra.mxu0 0
  %102 = vmatprep.subr.bf16.mxu0 0
  %103 = vmatpush1.bf16.xpose.msra.mxu0 0
  %104 = vmatprep.subr.bf16.mxu0 0
  %105 = vmatpush1.bf16.xpose.msra.mxu0 0
  %106 = vmatprep.subr.bf16.mxu0 0
  %107 = vmatpush1.bf16.xpose.msra.mxu0 0
  %108 = vmatprep.mubr.bf16.mxu0 0
  %109 = vmatmul.mubr.bf16.gmra.mrb[0].mxu0 %v28
  %v110 = vpop.f32.mrb[0].mxu0
  %v111 = vadd.f32 0.0, %v110
  %v112 = vpop.f32.mrb[0].mxu0
  %v113 = vpop.f32.mrb[0].mxu0
  %v114 = vpop.f32.mrb[0].mxu0
  %115 = vdwg.mxu0
  %v116 = vmul.f32 %v111, 2.0
  %v117 = vsub.f32 %v116, 2.0
  %v118 = vmul.f32 %v117, 1.442695
  %v119 = vpow.pop %v118
  %120 = vmatprep.subr.bf16.mxu0 0
  %121 = vmatpush1.bf16.xpose.msra.mxu0 %v30
  %122 = vmatprep.subr.bf16.mxu0 0
  %123 = vmatpush1.bf16.xpose.msra.mxu0 0
  %124 = vmatprep.subr.bf16.mxu0 0
  %125 = vmatpush1.bf16.xpose.msra.mxu0 0
  %126 = vmatprep.subr.bf16.mxu0 0
  %127 = vmatpush1.bf16.xpose.msra.mxu0 0
  %128 = vmatprep.subr.bf16.mxu0 0
  %129 = vmatpush1.bf16.xpose.msra.mxu0 0
  %130 = vmatprep.subr.bf16.mxu0 0
  %131 = vmatpush1.bf16.xpose.msra.mxu0 0
  %132 = vmatprep.subr.bf16.mxu0 0
  %133 = vmatpush1.bf16.xpose.msra.mxu0 0
  %134 = vmatprep.subr.bf16.mxu0 0
  %135 = vmatpush1.bf16.xpose.msra.mxu0 0
  %136 = vmatprep.subr.bf16.mxu0 0
  %137 = vmatpush1.bf16.xpose.msra.mxu0 0
  %138 = vmatprep.subr.bf16.mxu0 0
  %139 = vmatpush1.bf16.xpose.msra.mxu0 0
  %140 = vmatprep.subr.bf16.mxu0 0
  %141 = vmatpush1.bf16.xpose.msra.mxu0 0
  %142 = vmatprep.subr.bf16.mxu0 0
  %143 = vmatpush1.bf16.xpose.msra.mxu0 0
  %144 = vmatprep.subr.bf16.mxu0 0
  %145 = vmatpush1.bf16.xpose.msra.mxu0 0
  %146 = vmatprep.subr.bf16.mxu0 0
  %147 = vmatpush1.bf16.xpose.msra.mxu0 0
  %148 = vmatprep.subr.bf16.mxu0 0
  %149 = vmatpush1.bf16.xpose.msra.mxu0 0
  %150 = vmatprep.subr.bf16.mxu0 0
  %151 = vmatpush1.bf16.xpose.msra.mxu0 0
  %152 = vmatprep.mubr.bf16.mxu0 0
  %153 = vmatmul.mubr.bf16.gmra.mrb[0].mxu0 %v29
  %v154 = vpop.f32.mrb[0].mxu0
  %v155 = vadd.f32 0.0, %v154
  %v156 = vpop.f32.mrb[0].mxu0
  %v157 = vpop.f32.mrb[0].mxu0
  %v158 = vpop.f32.mrb[0].mxu0
  %159 = vdwg.mxu0
  %v160 = vmul.f32 %v155, 2.0
  %v161 = vsub.f32 %v160, 2.0
  %v162 = vmul.f32 %v161, 1.442695
  %v163 = vpow.pop %v162
  %164 = vmatprep.subr.bf16.mxu0 0
  %165 = vmatpush1.bf16.xpose.msra.mxu0 %v31
  %166 = vmatprep.subr.bf16.mxu0 0
  %167 = vmatpush1.bf16.xpose.msra.mxu0 0
  %168 = vmatprep.subr.bf16.mxu0 0
  %169 = vmatpush1.bf16.xpose.msra.mxu0 0
  %170 = vmatprep.subr.bf16.mxu0 0
  %171 = vmatpush1.bf16.xpose.msra.mxu0 0
  %172 = vmatprep.subr.bf16.mxu0 0
  %173 = vmatpush1.bf16.xpose.msra.mxu0 0
  %174 = vmatprep.subr.bf16.mxu0 0
  %175 = vmatpush1.bf16.xpose.msra.mxu0 0
  %176 = vmatprep.subr.bf16.mxu0 0
  %177 = vmatpush1.bf16.xpose.msra.mxu0 0
  %178 = vmatprep.subr.bf16.mxu0 0
  %179 = vmatpush1.bf16.xpose.msra.mxu0 0
  %180 = vmatprep.subr.bf16.mxu0 0
  %181 = vmatpush1.bf16.xpose.msra.mxu0 0
  %182 = vmatprep.subr.bf16.mxu0 0
  %183 = vmatpush1.bf16.xpose.msra.mxu0 0
  %184 = vmatprep.subr.bf16.mxu0 0
  %185 = vmatpush1.bf16.xpose.msra.mxu0 0
  %186 = vmatprep.subr.bf16.mxu0 0
  %187 = vmatpush1.bf16.xpose.msra.mxu0 0
  %188 = vmatprep.subr.bf16.mxu0 0
  %189 = vmatpush1.bf16.xpose.msra.mxu0 0
  %190 = vmatprep.subr.bf16.mxu0 0
  %191 = vmatpush1.bf16.xpose.msra.mxu0 0
  %192 = vmatprep.subr.bf16.mxu0 0
  %193 = vmatpush1.bf16.xpose.msra.mxu0 0
  %194 = vmatprep.subr.bf16.mxu0 0
  %195 = vmatpush1.bf16.xpose.msra.mxu0 0
  %196 = vmatprep.mubr.bf16.mxu0 0
  %197 = vmatmul.mubr.bf16.gmra.mrb[0].mxu0 %v29
  %v198 = vpop.f32.mrb[0].mxu0
  %v199 = vadd.f32 0.0, %v198
  %v200 = vpop.f32.mrb[0].mxu0
  %v201 = vpop.f32.mrb[0].mxu0
  %v202 = vpop.f32.mrb[0].mxu0
  %203 = vdwg.mxu0
  %v204 = vmul.f32 %v199, 2.0
  %v205 = vsub.f32 %v204, 2.0
  %v206 = vmul.f32 %v205, 1.442695
  %v207 = vpow.pop %v206
  %v208 = vld [vmem:[#allocation2] sm:$0xff]
  %v209 = vadd.f32 %v75, %v119
  %vm210 = vcmask 64512
  %v211 = vsel %vm210, %v209, 0.0
  %212 = vadd.xlane.f32.xlu0 %v211
  %v213 = vpop.xlane.xlu0 %212
  %v214 = vadd.f32 %v208, %v213
  %vm215 = vcmask 7168
  %216 = vst.msk [vmem:[#allocation2] sm:$0xff] %vm215, %v214
  %v217 = vld [vmem:[#allocation3] sm:$0xff]
  %v218 = vadd.f32 %v163, %v207
  %v219 = vsel %vm210, %v218, 0.0
  %220 = vadd.xlane.f32.xlu0 %v219
  %v221 = vpop.xlane.xlu0 %220
  %v222 = vadd.f32 %v217, %v221
  %223 = vst.msk [vmem:[#allocation3] sm:$0xff] %vm215, %v222
  %s224 = smul.u32 0, 8
  %s225 = sadd.s32 0, 1
  %s226 = smul.u32 %s225, 8
  %p227 = scmp.lt.s32.totalorder %s224, %s226
  %s228 = smul.u32 0, 8
  %s229 = sadd.s32 0, 1
  %s230 = smul.u32 %s229, 8
  %p231 = scmp.lt.s32.totalorder %s228, %s230
  %p232 = pnand %p227, %p231
  %p233 = pneg %p232
  // Predicated region
  $region26: #{tpu_custom_call.1} parent=0 // pred_check
    _
  $region27: #{tpu_custom_call.1} parent=0 // pred_check_branch
    %235 = sbr.rel (%p232) target = $region29
  $region28: #{tpu_custom_call.1} parent=0 // pred_region
    %v236 = vlaneseq
    %v237 = vshrl.u32 %v236, 7
    %v238 = vstv %s224
    %v239 = vadd.s32 %v238, %v237
    %v240 = vlaneseq
    %v241 = vand.u32 %v240, 127
    %v242 = vstv %s228
    %v243 = vadd.s32 %v242, %v241
    %vm244 = vcmp.eq.s32.totalorder %v239, %v243
    %v245 = vsel %vm244, 1, 0
    %v246 = vcvt.s32.f32 %v245
    %v247 = vld [vmem:[#allocation2] sm:$0xff]
    %v248 = vmul.f32 %v75, %v246
    %v249 = vsel %vm210, %v248, 0.0
    %250 = vadd.xlane.f32.xlu0 %v249
    %v251 = vpop.xlane.xlu0 %250
    %v252 = vsub.f32 %v247, %v251
    %253 = vst.msk [vmem:[#allocation2] sm:$0xff] %vm215, %v252
    %v254 = vld [vmem:[#allocation3] sm:$0xff]
    %v255 = vmul.f32 %v207, %v246
    %v256 = vsel %vm210, %v255, 0.0
    %257 = vadd.xlane.f32.xlu0 %v256
    %v258 = vpop.xlane.xlu0 %257
    %v259 = vsub.f32 %v254, %v258
    %260 = vst.msk [vmem:[#allocation3] sm:$0xff] %vm215, %v259
  $region29: #{tpu_custom_call.1} parent=0 // pred_fallthru
    _
  // Predicated region
  $region30: #{tpu_custom_call.1} parent=0 // pred_check
    %p261 = pneg %p21
  $region31: #{tpu_custom_call.1} parent=0 // pred_check_branch
    %263 = sbr.rel (%p261) target = $region33
  $region32: #{tpu_custom_call.1} parent=0 // pred_region
    %v264 = vlaneseq
    %v265 = vand.u32 %v264, 127
    %v266 = vstv %s228
    %v267 = vadd.s32 %v266, %v265
    %vm268 = vcmp.ge.s32.totalorder %v267, 4
    %v269 = vsel %vm268, 1, 0
    %v270 = vcvt.s32.f32 %v269
    %v271 = vld [vmem:[#allocation2] sm:$0xff]
    %v272 = vmul.f32 %v209, %v270
    %v273 = vsel %vm210, %v272, 0.0
    %274 = vadd.xlane.f32.xlu0 %v273
    %v275 = vpop.xlane.xlu0 %274
    %v276 = vsub.f32 %v271, %v275
    %277 = vst.msk [vmem:[#allocation2] sm:$0xff] %vm215, %v276
    %v278 = vld [vmem:[#allocation3] sm:$0xff]
    %v279 = vmul.f32 %v218, %v270
    %v280 = vsel %vm210, %v279, 0.0
    %281 = vadd.xlane.f32.xlu0 %v280
    %v282 = vpop.xlane.xlu0 %281
    %v283 = vsub.f32 %v278, %v282
    %284 = vst.msk [vmem:[#allocation3] sm:$0xff] %vm215, %v283
    %v285 = vld [vmem:[%s4] sm:$0xff]
    %v286 = vld [vmem:[#allocation2] sm:$0xff]
    %v287 = vlog2.pop %v286
    %v288 = vmul.f32 %v287, 0.6931472
    %v289 = vsub.f32 1.0, %v285
    %v290 = vmul.f32 %v289, 2.0
    %v291 = vadd.f32 %v288, %v290
    %v292 = vld [vmem:[#allocation3] sm:$0xff]
    %v293 = vlog2.pop %v292
    %v294 = vmul.f32 %v293, 0.6931472
    %v295 = vadd.f32 %v294, %v290
    %v296 = vlaneseq
    %v297 = vshrl.u32 %v296, 7
    %v298 = vstv %s224
    %v299 = vadd.s32 %v298, %v297
    %vm300 = vcmp.lt.s32.totalorder %v299, 4
    %v301 = vsel %vm300, %v291, 0.0
    %v302 = vsel %vm300, %v295, 0.0
    %304 = vrot.lane.b32.xlu0 %v302, 1
    %v305 = vpop.permute.xlu0 %304
    %v307 = vsel %vm215, %v301, %v305
    %vm308 = vcmask 15360
    %309 = vst.msk [vmem:[%s5] sm:$0xff] %vm308, %v307
  $region33: #{tpu_custom_call.1} parent=0 // pred_fallthru
    _
  // Predicated region
  $region34: #{tpu_custom_call.1} parent=0 // pred_check
    _
  $region35: #{tpu_custom_call.1} parent=0 // pred_check_branch
    %311 = sbr.rel (0) target = $region37
  $region36: #{tpu_custom_call.1} parent=0 // pred_region
    _
  $region37: #{tpu_custom_call.1} parent=0 // pred_fallthru
    _
  // Predicated region
  $region38: #{tpu_custom_call.1} parent=0 // pred_check
    _
  $region39: #{tpu_custom_call.1} parent=0 // pred_check_branch
    %313 = sbr.rel (0) target = $region41
  $region40: #{tpu_custom_call.1} parent=0 // pred_region
    _
  $region41: #{tpu_custom_call.1} parent=0 // pred_fallthru
    _

</llo_original>
